<compile_context>
chip_gen: v5e
topology: v5e:2x2
jax: 0.10.0
libtpu: 0.0.40
codegen_flags: <defaults>
</compile_context>

<pallas_src>
import jax
import jax.numpy as jnp
from jax.experimental import pallas as pl
from jax.experimental.pallas import tpu as pltpu


def _identity_kernel(mass_ref, out_ref):
    # Pure scalar copy on the scalar path (SMEM sld -> SMEM sst); no vector
    # load/store slots, no VMEM tile, no DMA, no compute.
    out_ref[0] = mass_ref[0]


def unconstrained_mass_value_forward(mass: jax.Array, *, use_kernel: bool = False) -> jax.Array:
    """Pallas/JAX equivalent of UnconstrainedMassValue.forward().

    Args:
      mass: f32[1] parameter (analogue of torch.nn.Parameter(torch.rand(1))).
      use_kernel: if False (production default, fastest), return the parameter
        directly — forward() is an identity, so no kernel launch is needed and
        XLA can fuse the parameter straight into consumers.  If True, run the
        minimal SMEM identity Pallas kernel (test / explicit-op path).

    Returns:
      f32[1], identical in value to the parameter.
    """
    assert mass.shape == (1,)

    if not use_kernel:
        # Highest-value optimization: forward() is an identity on a 4-byte
        # scalar, so skip the custom-call launch entirely.
        return mass

    # Test-only explicit-op path.  Grid-less, scratch-less, VMEM-free:
    # the scalar rides the SMEM path on both sides.  No input/output alias —
    # the parameter buffer is not donated, and aliasing a 4-byte output buys
    # nothing while risking a defensive copy.
    return pl.pallas_call(
        _identity_kernel,
        out_shape=jax.ShapeDtypeStruct(mass.shape, mass.dtype),
        in_specs=[pl.BlockSpec(memory_space=pltpu.MemorySpace.SMEM)],
        out_specs=pl.BlockSpec(memory_space=pltpu.MemorySpace.SMEM),
    )(mass)


class UnconstrainedMassValue:
    """Minimal JAX/Pallas port of the torch module (forward only)."""

    def __init__(self, init_val=None, key=None, use_kernel: bool = False):
        if init_val is None:
            # torch.rand(1) analogue: uniform [0, 1), deterministic via key.
            key = jax.random.PRNGKey(0) if key is None else key
            self.mass = jax.random.uniform(key, (1,), dtype=jnp.float32)
        else:
            self.mass = jnp.asarray(init_val, dtype=jnp.float32).reshape(1)
        self.use_kernel = use_kernel
        # TODO(synk): Parameter/gradient registration is the caller's optimizer's
        # job in JAX; only the forward pass is implemented here.

    def __call__(self):
        return unconstrained_mass_value_forward(self.mass, use_kernel=self.use_kernel)


if __name__ == "__main__":
    key = jax.random.PRNGKey(0)

    # Deterministic parameter init (mirrors torch.nn.Parameter(torch.rand(1))).
    module = UnconstrainedMassValue(key=key, use_kernel=True)

    # Test-only kernel path (SMEM scalar identity, no alias, no grid).
    out_kernel = jax.block_until_ready(module())

    # Production path: return the parameter directly, zero launch overhead.
    out_direct = jax.block_until_ready(
        unconstrained_mass_value_forward(module.mass, use_kernel=False)
    )

    # Correctness checks against the trivial reference (forward == parameter).
    assert out_kernel.shape == (1,) and out_kernel.dtype == jnp.float32
    assert out_direct.shape == (1,) and out_direct.dtype == jnp.float32
    assert jnp.allclose(out_kernel, module.mass), (out_kernel, module.mass)
    assert jnp.allclose(out_direct, module.mass), (out_direct, module.mass)

    print("KERNEL_OK")
</pallas_src>

<mosaic_0001>
module attributes {stable_mosaic.version = 11 : i64} {
  func.func @_identity_kernel(%arg0: memref<1xf32, #tpu.memory_space<smem>>, %arg1: memref<1xf32, #tpu.memory_space<smem>>) attributes {dimension_semantics = [], scalar_prefetch = 0 : i64, scratch_operands = 0 : i64, tpu.core_type = #tpu.core_type<tc>} {
    %c0 = arith.constant 0 : index
    %0 = memref.load %arg0[%c0] : memref<1xf32, #tpu.memory_space<smem>>
    %c0_0 = arith.constant 0 : index
    %1 = memref.load %arg1[%c0_0] : memref<1xf32, #tpu.memory_space<smem>>
    memref.store %0, %arg1[%c0_0] : memref<1xf32, #tpu.memory_space<smem>>
    return
  }
}

</mosaic_0001>

<llo_original>
// kernel: tpu_custom_call.1
$region0: #{tpu_custom_call.1}
  #allocation0 [shape = 'u32[]', space=smem, size = 0x4, offset = 0x4, fixed_abs, tag = 'smem constant byte address 0x4 - core index']
  #allocation1 [shape = 'u32[72,128]{1,0:T(1,128)}', space=vmem, size = 0x9000, scoped, tag = 'internal scratch']
  #allocation2 [shape = 'f32[1]{0:T(128)S(6)}', space=smem, size = 0x200, scoped, tag = 'scoped memory for tpu_custom_call.1']
  %s0 = inlined_call_operand.<no memory space> [shape: f32[1], index: 0, kind: input, shape index: {}]
  %s1 = inlined_call_operand.hbm [shape: f32[1], index: 1, kind: output, shape index: {}]
  %s2 = sld [smem:[#allocation0]]
  $region14: #{tpu_custom_call.1} parent=0
    _
  %s4 = ssub.s32 1, %s2
  %s5 = scalar_select 0, %s4, %s2
  %6 = sst [smem:[#allocation2]] %s0
  $region1: #{tpu_custom_call.1} parent=0
    #allocation3 [shape = 'u8[512]{0}', space=smem, size = 0x200, scoped, tag = 'output window, operand 0, single buffered']
    #allocation4 [shape = 's32[1]{0}', space=sflag, size = 0x4, scoped, tag = 'scoped memory for tpu_custom_call.1']
    %7 = vsyncpa [#allocation4], 0
    // Predicated region
    $region2: #{tpu_custom_call.1} parent=1 // pred_check
      _
    $region3: #{tpu_custom_call.1} parent=1 // pred_check_branch
      %9 = sbr.rel (0) target = $region5
    $region4: #{tpu_custom_call.1} parent=1 // pred_region
      _
    $region5: #{tpu_custom_call.1} parent=1 // pred_fallthru
      _
    %s10 = sld [smem:[#allocation2]]
    %s11 = scalar_lea.smem [#allocation3], 0
    %12 = sst [smem:[%s11]] %s10
    // Predicated region
    $region6: #{tpu_custom_call.1} parent=1 // pred_check
      _
    $region7: #{tpu_custom_call.1} parent=1 // pred_check_branch
      %14 = sbr.rel (0) target = $region9
    $region8: #{tpu_custom_call.1} parent=1 // pred_region
      %16 = vsyncadd [#allocation4], 0
      %s18 = sshll.u32 %s1, 4
      %s19 = int_to_ptr.hbm [resolvable:$true] %s18
      %21 = dma.smem_to_hbm [#allocation3], 16, %s19, [#allocation4]
    $region9: #{tpu_custom_call.1} parent=1 // pred_fallthru
      _
    // Predicated region
    $region10: #{tpu_custom_call.1} parent=1 // pred_check
      _
    $region11: #{tpu_custom_call.1} parent=1 // pred_check_branch
      %23 = sbr.rel (0) target = $region13
    $region12: #{tpu_custom_call.1} parent=1 // pred_region
      %25 = dma.done [#allocation4], 16
    $region13: #{tpu_custom_call.1} parent=1 // pred_fallthru
      _
    %26 = sfence
    %27 = vsyncpa [#allocation4], 1

</llo_original>
